<compile_context>
chip_gen: v7x
topology: tpu7x:2x2x1
jax: 0.10.0
libtpu: 0.0.40
codegen_flags: <defaults>
</compile_context>

<pallas_src>
import jax
import jax.numpy as jnp
from jax.experimental import pallas as pl
from jax.experimental.pallas import tpu as pltpu


def _mlp_kernel(x_ref, w1t_ref, b1_ref, w2t_ref, b2_ref, w3t_ref, b3_ref, o_ref):
    """One batch tile of the fused 3-layer MLP (batch along lanes)."""
    x = x_ref[...]          # (D_in, TM) f32
    w1t = w1t_ref[...]      # (16, D_in)
    b1 = b1_ref[...]        # (16, 1)  loaded once, broadcast along lanes
    b2 = b2_ref[...]        # (8, 1)
    b3 = b3_ref[...]        # (1, 1)

    if w1t.shape[1] == 1:
        # input_dim == 1: layer 1 is an outer product -> VPU broadcast multiply.
        h1 = w1t * x                                        # (16,1)*(1,TM) -> (16,TM)
    else:
        h1 = jnp.dot(w1t, x, preferred_element_type=jnp.float32)
    h1 = jnp.maximum(h1 + b1, 0.0)                          # (16, TM)

    h2 = jnp.dot(w2t_ref[...], h1, preferred_element_type=jnp.float32) + b2
    h2 = jnp.maximum(h2, 0.0)                               # (8, TM)

    out = jnp.dot(w3t_ref[...], h2, preferred_element_type=jnp.float32) + b3
    o_ref[...] = out.astype(o_ref.dtype)                    # (1, TM) lane-dense store


def simple_rl_model_forward(x, params, *, tile_b=512):
    """Forward pass of SimpleRLModel.

    x: (B, input_dim) float32
    params: w1 (in,16), b1 (16,), w2 (16,8), b2 (8,), w3 (8,1), b3 (1,)
            (weights stored (in, out); same math as PyTorch's x @ W.T + b)
    returns: (B, 1) float32
    """
    B, d_in = x.shape
    w1, b1 = params["w1"], params["b1"]
    w2, b2 = params["w2"], params["b2"]
    w3, b3 = params["w3"], params["b3"]
    h1_dim, h2_dim = w1.shape[1], w2.shape[1]       # 16, 8

    # --- wrapper-side layout plumbing: batch-in-lanes orientation ---
    x_t = x.T.astype(jnp.float32)                   # (D_in, B)
    w1t = w1.T                                      # (16, D_in)
    w2t = w2.T                                      # (8, 16)
    w3t = w3.T                                      # (1, 8)
    b1c = b1.reshape(h1_dim, 1)
    b2c = b2.reshape(h2_dim, 1)
    b3c = b3.reshape(1, 1)

    # Batch tile: multiple of 128 lanes. Per-tile buffers are a few KB, so even
    # double-buffered this is far below scoped VMEM on v5e/v6e (32 MiB default)
    # and v7x (64 MiB physical).
    tm = max(128, min(tile_b, pl.cdiv(B, 128) * 128))
    b_pad = pl.cdiv(B, tm) * tm
    if b_pad != B:
        x_t = jnp.pad(x_t, ((0, 0), (0, b_pad - B)))
    grid = (b_pad // tm,)

    n_params = sum(int(p.size) for p in (w1, b1, w2, b2, w3, b3))
    cost = pl.CostEstimate(
        flops=2 * B * (d_in * h1_dim + h1_dim * h2_dim + h2_dim * 1),
        transcendentals=0,
        bytes_accessed=4 * (B * d_in + B + n_params),
    )

    out_pad = pl.pallas_call(
        _mlp_kernel,
        out_shape=jax.ShapeDtypeStruct((1, b_pad), jnp.float32),
        grid=grid,
        in_specs=[
            pl.BlockSpec((d_in, tm), lambda i: (0, i)),   # x tile: batch along lanes
            pl.BlockSpec(w1t.shape, lambda i: (0, 0)),    # weights/biases: resident
            pl.BlockSpec(b1c.shape, lambda i: (0, 0)),
            pl.BlockSpec(w2t.shape, lambda i: (0, 0)),
            pl.BlockSpec(b2c.shape, lambda i: (0, 0)),
            pl.BlockSpec(w3t.shape, lambda i: (0, 0)),
            pl.BlockSpec(b3c.shape, lambda i: (0, 0)),
        ],
        out_specs=pl.BlockSpec((1, tm), lambda i: (0, i)),
        compiler_params=pltpu.CompilerParams(
            dimension_semantics=("parallel",),            # shard batch across TCs (v7x)
        ),
        cost_estimate=cost,
    )(x_t, w1t, b1c, w2t, b2c, w3t, b3c)

    return out_pad[:, :B].T                               # (B, 1)


def init_params(key, input_dim=1):
    """Deterministic synthetic parameters matching SimpleRLModel's shapes."""
    ks = jax.random.split(key, 6)
    w1 = jax.random.normal(ks[0], (input_dim, 16), jnp.float32) * 0.5
    b1 = jax.random.normal(ks[1], (16,), jnp.float32) * 0.1
    w2 = jax.random.normal(ks[2], (16, 8), jnp.float32) * 0.25
    b2 = jax.random.normal(ks[3], (8,), jnp.float32) * 0.1
    w3 = jax.random.normal(ks[4], (8, 1), jnp.float32) * 0.25
    b3 = jax.random.normal(ks[5], (1,), jnp.float32) * 0.1
    return {"w1": w1, "b1": b1, "w2": w2, "b2": b2, "w3": w3, "b3": b3}


def reference_forward(x, p):
    h1 = jnp.maximum(x @ p["w1"] + p["b1"], 0.0)
    h2 = jnp.maximum(h1 @ p["w2"] + p["b2"], 0.0)
    return h2 @ p["w3"] + p["b3"]


if __name__ == "__main__":
    key = jax.random.PRNGKey(0)
    k_x, k_x2, k_p = jax.random.split(key, 3)

    # Small case matching the module default (input_dim=1).
    B, input_dim = 8, 1
    x = jax.random.normal(k_x, (B, input_dim), jnp.float32)
    params = init_params(k_p, input_dim=input_dim)

    out = jax.block_until_ready(simple_rl_model_forward(x, params))
    ref = reference_forward(x, params)
    assert out.shape == (B, 1)
    assert jnp.allclose(out, ref, atol=1e-5, rtol=1e-5)

    # Larger, non-multiple batch: exercises the batch grid (2 tiles) + padding.
    B2 = 600
    x2 = jax.random.normal(k_x2, (B2, input_dim), jnp.float32)
    out2 = jax.block_until_ready(simple_rl_model_forward(x2, params))
    ref2 = reference_forward(x2, params)
    assert out2.shape == (B2, 1)
    assert jnp.allclose(out2, ref2, atol=1e-5, rtol=1e-5)

    print("KERNEL_OK")
</pallas_src>

<mosaic_0001>
module attributes {stable_mosaic.version = 11 : i64} {
  func.func @_mlp_kernel(%arg0: i32, %arg1: memref<1x128xf32, #tpu.memory_space<vmem>>, %arg2: memref<16x1xf32, #tpu.memory_space<vmem>>, %arg3: memref<16x1xf32, #tpu.memory_space<vmem>>, %arg4: memref<8x16xf32, #tpu.memory_space<vmem>>, %arg5: memref<8x1xf32, #tpu.memory_space<vmem>>, %arg6: memref<1x8xf32, #tpu.memory_space<vmem>>, %arg7: memref<1x1xf32, #tpu.memory_space<vmem>>, %arg8: memref<1x128xf32, #tpu.memory_space<vmem>>) attributes {dimension_semantics = [#tpu.dimension_semantics<parallel>], iteration_bounds = array<i64: 1>, scalar_prefetch = 0 : i64, scratch_operands = 0 : i64, tpu.core_type = #tpu.core_type<tc>, window_params = [{transform_indices = @transform_0, window_bounds = array<i64: 1, 128>}, {pipeline_mode = #tpu.pipeline_mode<synchronous>, transform_indices = @transform_1, window_bounds = array<i64: 16, 1>}, {pipeline_mode = #tpu.pipeline_mode<synchronous>, transform_indices = @transform_2, window_bounds = array<i64: 16, 1>}, {pipeline_mode = #tpu.pipeline_mode<synchronous>, transform_indices = @transform_3, window_bounds = array<i64: 8, 16>}, {pipeline_mode = #tpu.pipeline_mode<synchronous>, transform_indices = @transform_4, window_bounds = array<i64: 8, 1>}, {pipeline_mode = #tpu.pipeline_mode<synchronous>, transform_indices = @transform_5, window_bounds = array<i64: 1, 8>}, {pipeline_mode = #tpu.pipeline_mode<synchronous>, transform_indices = @transform_6, window_bounds = array<i64: 1, 1>}, {transform_indices = @transform_7, window_bounds = array<i64: 1, 128>}]} {
    %c0 = arith.constant 0 : index
    %c0_0 = arith.constant 0 : index
    %0 = vector.load %arg1[%c0, %c0_0] : memref<1x128xf32, #tpu.memory_space<vmem>>, vector<1x128xf32>
    %c0_1 = arith.constant 0 : index
    %c0_2 = arith.constant 0 : index
    %1 = vector.load %arg2[%c0_1, %c0_2] : memref<16x1xf32, #tpu.memory_space<vmem>>, vector<16x1xf32>
    %c0_3 = arith.constant 0 : index
    %c0_4 = arith.constant 0 : index
    %2 = vector.load %arg3[%c0_3, %c0_4] : memref<16x1xf32, #tpu.memory_space<vmem>>, vector<16x1xf32>
    %c0_5 = arith.constant 0 : index
    %c0_6 = arith.constant 0 : index
    %3 = vector.load %arg5[%c0_5, %c0_6] : memref<8x1xf32, #tpu.memory_space<vmem>>, vector<8x1xf32>
    %c0_7 = arith.constant 0 : index
    %c0_8 = arith.constant 0 : index
    %4 = vector.load %arg7[%c0_7, %c0_8] : memref<1x1xf32, #tpu.memory_space<vmem>>, vector<1x1xf32>
    %5 = vector.broadcast %1 : vector<16x1xf32> to vector<16x128xf32>
    %6 = vector.broadcast %0 : vector<1x128xf32> to vector<16x128xf32>
    %7 = arith.mulf %5, %6 : vector<16x128xf32>
    %8 = vector.broadcast %2 : vector<16x1xf32> to vector<16x128xf32>
    %9 = arith.addf %7, %8 : vector<16x128xf32>
    %cst = arith.constant 0.000000e+00 : f32
    %10 = vector.broadcast %cst : f32 to vector<16x128xf32>
    %11 = arith.maximumf %9, %10 : vector<16x128xf32>
    %c0_9 = arith.constant 0 : index
    %c0_10 = arith.constant 0 : index
    %12 = vector.load %arg4[%c0_9, %c0_10] : memref<8x16xf32, #tpu.memory_space<vmem>>, vector<8x16xf32>
    %cst_11 = arith.constant dense<0.000000e+00> : vector<8x128xf32>
    %13 = tpu.matmul %12, %11, %cst_11 {dimension_numbers = #tpu.dot_dimension_numbers<[1], [0], [0], [1], [0, 0, 1, 1], [], []>} : vector<8x16xf32>, vector<16x128xf32>, vector<8x128xf32> -> vector<8x128xf32>
    %14 = vector.broadcast %3 : vector<8x1xf32> to vector<8x128xf32>
    %15 = arith.addf %13, %14 : vector<8x128xf32>
    %cst_12 = arith.constant 0.000000e+00 : f32
    %16 = vector.broadcast %cst_12 : f32 to vector<8x128xf32>
    %17 = arith.maximumf %15, %16 : vector<8x128xf32>
    %c0_13 = arith.constant 0 : index
    %c0_14 = arith.constant 0 : index
    %18 = vector.load %arg6[%c0_13, %c0_14] : memref<1x8xf32, #tpu.memory_space<vmem>>, vector<1x8xf32>
    %cst_15 = arith.constant dense<0.000000e+00> : vector<1x128xf32>
    %19 = tpu.matmul %18, %17, %cst_15 {dimension_numbers = #tpu.dot_dimension_numbers<[1], [0], [0], [1], [0, 0, 1, 1], [], []>} : vector<1x8xf32>, vector<8x128xf32>, vector<1x128xf32> -> vector<1x128xf32>
    %20 = vector.broadcast %4 : vector<1x1xf32> to vector<1x128xf32>
    %21 = arith.addf %19, %20 : vector<1x128xf32>
    %c0_16 = arith.constant 0 : index
    %c0_17 = arith.constant 0 : index
    %22 = vector.load %arg8[%c0_16, %c0_17] : memref<1x128xf32, #tpu.memory_space<vmem>>, vector<1x128xf32>
    tpu.vector_store %arg8[%c0_16, %c0_17], %21 {strides = array<i32>} : memref<1x128xf32, #tpu.memory_space<vmem>>, vector<1x128xf32>,
    return
  }
  func.func @transform_0(%arg0: i32) -> (i32, i32) {
    %c0_i32 = arith.constant 0 : i32
    %c0_i32_0 = arith.constant 0 : i32
    return %c0_i32, %arg0 : i32, i32
  }
  func.func @transform_1(%arg0: i32) -> (i32, i32) {
    %c0_i32 = arith.constant 0 : i32
    %c0_i32_0 = arith.constant 0 : i32
    %c0_i32_1 = arith.constant 0 : i32
    return %c0_i32, %c0_i32_0 : i32, i32
  }
  func.func @transform_2(%arg0: i32) -> (i32, i32) {
    %c0_i32 = arith.constant 0 : i32
    %c0_i32_0 = arith.constant 0 : i32
    %c0_i32_1 = arith.constant 0 : i32
    return %c0_i32, %c0_i32_0 : i32, i32
  }
  func.func @transform_3(%arg0: i32) -> (i32, i32) {
    %c0_i32 = arith.constant 0 : i32
    %c0_i32_0 = arith.constant 0 : i32
    %c0_i32_1 = arith.constant 0 : i32
    return %c0_i32, %c0_i32_0 : i32, i32
  }
  func.func @transform_4(%arg0: i32) -> (i32, i32) {
    %c0_i32 = arith.constant 0 : i32
    %c0_i32_0 = arith.constant 0 : i32
    %c0_i32_1 = arith.constant 0 : i32
    return %c0_i32, %c0_i32_0 : i32, i32
  }
  func.func @transform_5(%arg0: i32) -> (i32, i32) {
    %c0_i32 = arith.constant 0 : i32
    %c0_i32_0 = arith.constant 0 : i32
    %c0_i32_1 = arith.constant 0 : i32
    return %c0_i32, %c0_i32_0 : i32, i32
  }
  func.func @transform_6(%arg0: i32) -> (i32, i32) {
    %c0_i32 = arith.constant 0 : i32
    %c0_i32_0 = arith.constant 0 : i32
    %c0_i32_1 = arith.constant 0 : i32
    return %c0_i32, %c0_i32_0 : i32, i32
  }
  func.func @transform_7(%arg0: i32) -> (i32, i32) {
    %c0_i32 = arith.constant 0 : i32
    %c0_i32_0 = arith.constant 0 : i32
    return %c0_i32, %arg0 : i32, i32
  }
}

</mosaic_0001>

<llo_original>
// kernel: tpu_custom_call.1
$region0: #{tpu_custom_call.1}
  #allocation0 [shape = 'u32[]', space=smem, size = 0x4, offset = 0x4, fixed_abs, tag = 'smem constant byte address 0x4 - core index']
  #allocation1 [shape = 'u32[144,128]{1,0:T(1,128)}', space=vmem, size = 0x12000, scoped, tag = 'internal scratch']
  #allocation2 [shape = 'f32[1,1]{1,0:T(1,128)S(1)}', space=vmem, size = 0x200, scoped, tag = 'scoped memory for tpu_custom_call.1']
  %s0 = inlined_call_operand.vmem [shape: f32[1,128], index: 0, kind: input, shape index: {}]
  %s1 = inlined_call_operand.vmem [shape: f32[16,1], index: 1, kind: input, shape index: {}]
  %s2 = inlined_call_operand.vmem [shape: f32[16,1], index: 2, kind: input, shape index: {}]
  %s3 = inlined_call_operand.vmem [shape: f32[8,16], index: 3, kind: input, shape index: {}]
  %s4 = inlined_call_operand.vmem [shape: f32[8,1], index: 4, kind: input, shape index: {}]
  %s5 = inlined_call_operand.vmem [shape: f32[1,8], index: 5, kind: input, shape index: {}]
  %s6 = inlined_call_operand.<no memory space> [shape: f32[1,1], index: 6, kind: input, shape index: {}]
  %s7 = inlined_call_operand.hbm [shape: f32[1,128], index: 7, kind: output, shape index: {}]
  %s8 = sld [smem:[#allocation0]]
  $region38: #{tpu_custom_call.1} parent=0
    _
  %s10 = ssub.s32 1, %s8
  %s11 = scalar_select 0, %s10, %s8
  %v12 = vstv %s6
  %13 = vst [vmem:[#allocation2] sm:$0x1] %v12
  $region1: #{tpu_custom_call.1} parent=0
    #allocation3 [shape = 'u8[512]{0}', space=vmem, size = 0x400, scoped, tag = 'output window, operand 0, single buffered']
    #allocation4 [shape = 's32[1]{0}', space=sflag, size = 0x4, scoped, tag = 'scoped memory for tpu_custom_call.1']
    %14 = vsyncpa [#allocation4], 0
    // Predicated region
    $region2: #{tpu_custom_call.1} parent=1 // pred_check
      _
    $region3: #{tpu_custom_call.1} parent=1 // pred_check_branch
      %16 = sbr.rel (0) target = $region5
    $region4: #{tpu_custom_call.1} parent=1 // pred_region
      _
    $region5: #{tpu_custom_call.1} parent=1 // pred_fallthru
      _
    // Predicated region
    $region6: #{tpu_custom_call.1} parent=1 // pred_check
      _
    $region7: #{tpu_custom_call.1} parent=1 // pred_check_branch
      %18 = sbr.rel (0) target = $region9
    $region8: #{tpu_custom_call.1} parent=1 // pred_region
      _
    $region9: #{tpu_custom_call.1} parent=1 // pred_fallthru
      _
    // Predicated region
    $region10: #{tpu_custom_call.1} parent=1 // pred_check
      _
    $region11: #{tpu_custom_call.1} parent=1 // pred_check_branch
      %20 = sbr.rel (0) target = $region13
    $region12: #{tpu_custom_call.1} parent=1 // pred_region
      _
    $region13: #{tpu_custom_call.1} parent=1 // pred_fallthru
      _
    // Predicated region
    $region14: #{tpu_custom_call.1} parent=1 // pred_check
      _
    $region15: #{tpu_custom_call.1} parent=1 // pred_check_branch
      %22 = sbr.rel (0) target = $region17
    $region16: #{tpu_custom_call.1} parent=1 // pred_region
      _
    $region17: #{tpu_custom_call.1} parent=1 // pred_fallthru
      _
    // Predicated region
    $region18: #{tpu_custom_call.1} parent=1 // pred_check
      _
    $region19: #{tpu_custom_call.1} parent=1 // pred_check_branch
      %24 = sbr.rel (0) target = $region21
    $region20: #{tpu_custom_call.1} parent=1 // pred_region
      _
    $region21: #{tpu_custom_call.1} parent=1 // pred_fallthru
      _
    // Predicated region
    $region22: #{tpu_custom_call.1} parent=1 // pred_check
      _
    $region23: #{tpu_custom_call.1} parent=1 // pred_check_branch
      %26 = sbr.rel (0) target = $region25
    $region24: #{tpu_custom_call.1} parent=1 // pred_region
      _
    $region25: #{tpu_custom_call.1} parent=1 // pred_fallthru
      _
    // Predicated region
    $region26: #{tpu_custom_call.1} parent=1 // pred_check
      _
    $region27: #{tpu_custom_call.1} parent=1 // pred_check_branch
      %28 = sbr.rel (0) target = $region29
    $region28: #{tpu_custom_call.1} parent=1 // pred_region
      _
    $region29: #{tpu_custom_call.1} parent=1 // pred_fallthru
      _
    %v29 = vld [vmem:[%s0] sm:$0x1]
    %v30 = vld [vmem:[%s1] sm:$0xff]
    %v31 = vld [vmem:[%s1 + $0x8] sm:$0xff]
    %v32 = vld [vmem:[%s2] sm:$0xff]
    %v33 = vld [vmem:[%s2 + $0x8] sm:$0xff]
    %v34 = vld [vmem:[%s4] sm:$0xff]
    %v35 = vld [vmem:[#allocation2] sm:$0x1]
    %37 = vset.pattern.permute.xlu0 0
    %38 = vperm.xlu0 %37, %v30
    %v39 = vpop.permute.xlu0 %38
    %42 = vset.pattern.permute.xlu0 0
    %43 = vperm.xlu0 %42, %v31
    %v44 = vpop.permute.xlu0 %43
    %v47 = vlaneseq
    %v48 = vshrl.u32 %v47, 7
    %v49 = vsub.s32 0, %v48
    %v50 = vrot.slane %v29, %v49
    %v52 = vmul.f32 %v39, %v50
    %v53 = vmul.f32 %v44, %v50
    %55 = vset.pattern.permute.xlu0 0
    %56 = vperm.xlu0 %55, %v32
    %v57 = vpop.permute.xlu0 %56
    %60 = vset.pattern.permute.xlu0 0
    %61 = vperm.xlu0 %60, %v33
    %v62 = vpop.permute.xlu0 %61
    %v64 = vadd.f32 %v52, %v57
    %v65 = vadd.f32 %v53, %v62
    %v66 = vmax.f32 %v64, 0.0
    %v67 = vmax.f32 %v65, 0.0
    %v68 = vld [vmem:[%s3] sm:$0xff]
    %70 = vset.pattern.permute.xlu0 0
    %71 = vperm.xlu0 %70, %v34
    %v72 = vpop.permute.xlu0 %71
    %vm74 = vcmask 130048
    %v76 = vsel %vm74, %v68, 0
    %78 = vmatprep.subr.mxu0 0.0
    %79 = vmatpush1.msra.mxu0 %v66
    %80 = vmatprep.subr.mxu0 0.0
    %81 = vmatpush1.msra.mxu0 %v67
    %82 = vmatprep.subr.mxu0 0.0
    %83 = vmatpush1.msra.mxu0 0.0
    %84 = vmatprep.subr.mxu0 0.0
    %85 = vmatpush1.msra.mxu0 0.0
    %86 = vmatprep.subr.mxu0 0.0
    %87 = vmatpush1.msra.mxu0 0.0
    %88 = vmatprep.subr.mxu0 0.0
    %89 = vmatpush1.msra.mxu0 0.0
    %90 = vmatprep.subr.mxu0 0.0
    %91 = vmatpush1.msra.mxu0 0.0
    %92 = vmatprep.subr.mxu0 0.0
    %93 = vmatpush1.msra.mxu0 0.0
    %94 = vmatprep.subr.mxu0 0.0
    %95 = vmatpush1.msra.mxu0 0.0
    %96 = vmatprep.subr.mxu0 0.0
    %97 = vmatpush1.msra.mxu0 0.0
    %98 = vmatprep.subr.mxu0 0.0
    %99 = vmatpush1.msra.mxu0 0.0
    %100 = vmatprep.subr.mxu0 0.0
    %101 = vmatpush1.msra.mxu0 0.0
    %102 = vmatprep.subr.mxu0 0.0
    %103 = vmatpush1.msra.mxu0 0.0
    %104 = vmatprep.subr.mxu0 0.0
    %105 = vmatpush1.msra.mxu0 0.0
    %106 = vmatprep.subr.mxu0 0.0
    %107 = vmatpush1.msra.mxu0 0.0
    %108 = vmatprep.subr.mxu0 0.0
    %109 = vmatpush1.msra.mxu0 0.0
    %110 = vmatprep.subr.mxu0 0.0
    %111 = vmatpush1.msra.mxu0 0.0
    %112 = vmatprep.subr.mxu0 0.0
    %113 = vmatpush1.msra.mxu0 0.0
    %114 = vmatprep.subr.mxu0 0.0
    %115 = vmatpush1.msra.mxu0 0.0
    %116 = vmatprep.subr.mxu0 0.0
    %117 = vmatpush1.msra.mxu0 0.0
    %118 = vmatprep.subr.mxu0 0.0
    %119 = vmatpush1.msra.mxu0 0.0
    %120 = vmatprep.subr.mxu0 0.0
    %121 = vmatpush1.msra.mxu0 0.0
    %122 = vmatprep.subr.mxu0 0.0
    %123 = vmatpush1.msra.mxu0 0.0
    %124 = vmatprep.subr.mxu0 0.0
    %125 = vmatpush1.msra.mxu0 0.0
    %126 = vmatprep.subr.mxu0 0.0
    %127 = vmatpush1.msra.mxu0 0.0
    %128 = vmatprep.subr.mxu0 0.0
    %129 = vmatpush1.msra.mxu0 0.0
    %130 = vmatprep.subr.mxu0 0.0
    %131 = vmatpush1.msra.mxu0 0.0
    %132 = vmatprep.subr.mxu0 0.0
    %133 = vmatpush1.msra.mxu0 0.0
    %134 = vmatprep.subr.mxu0 0.0
    %135 = vmatpush1.msra.mxu0 0.0
    %136 = vmatprep.subr.mxu0 0.0
    %137 = vmatpush1.msra.mxu0 0.0
    %138 = vmatprep.subr.mxu0 0.0
    %139 = vmatpush1.msra.mxu0 0.0
    %140 = vmatprep.subr.mxu0 0.0
    %141 = vmatpush1.msra.mxu0 0.0
    %142 = vmatprep.mubr.f32.mxu0 0.0
    %143 = vmatmul.mubr.f32.gmra.mrb[0].mxu0 %v76
    %v144 = vpop.f32.mrb[0].mxu0
    %v145 = vadd.f32 %v72, %v144
    %v146 = vpop.f32.mrb[0].mxu0
    %147 = vdwg.mxu0
    %v148 = vmax.f32 %v145, 0.0
    %v149 = vld [vmem:[%s5] sm:$0x1]
    %151 = vset.pattern.permute.xlu0 0
    %152 = vperm.xlu0 %151, %v35
    %v153 = vpop.permute.xlu0 %152
    %v155 = vlaneseq
    %v156 = vshrl.u32 %v155, 7
    %v157 = vsub.s32 0, %v156
    %v158 = vrot.slane %v153, %v157
    %vm159 = vcmask 64512
    %v161 = vsel %vm159, %v149, 0
    %163 = vmatprep.subr.mxu0 0.0
    %164 = vmatpush1.msra.mxu0 %v148
    %165 = vmatprep.subr.mxu0 0.0
    %166 = vmatpush1.msra.mxu0 0.0
    %167 = vmatprep.subr.mxu0 0.0
    %168 = vmatpush1.msra.mxu0 0.0
    %169 = vmatprep.subr.mxu0 0.0
    %170 = vmatpush1.msra.mxu0 0.0
    %171 = vmatprep.subr.mxu0 0.0
    %172 = vmatpush1.msra.mxu0 0.0
    %173 = vmatprep.subr.mxu0 0.0
    %174 = vmatpush1.msra.mxu0 0.0
    %175 = vmatprep.subr.mxu0 0.0
    %176 = vmatpush1.msra.mxu0 0.0
    %177 = vmatprep.subr.mxu0 0.0
    %178 = vmatpush1.msra.mxu0 0.0
    %179 = vmatprep.subr.mxu0 0.0
    %180 = vmatpush1.msra.mxu0 0.0
    %181 = vmatprep.subr.mxu0 0.0
    %182 = vmatpush1.msra.mxu0 0.0
    %183 = vmatprep.subr.mxu0 0.0
    %184 = vmatpush1.msra.mxu0 0.0
    %185 = vmatprep.subr.mxu0 0.0
    %186 = vmatpush1.msra.mxu0 0.0
    %187 = vmatprep.subr.mxu0 0.0
    %188 = vmatpush1.msra.mxu0 0.0
    %189 = vmatprep.subr.mxu0 0.0
    %190 = vmatpush1.msra.mxu0 0.0
    %191 = vmatprep.subr.mxu0 0.0
    %192 = vmatpush1.msra.mxu0 0.0
    %193 = vmatprep.subr.mxu0 0.0
    %194 = vmatpush1.msra.mxu0 0.0
    %195 = vmatprep.subr.mxu0 0.0
    %196 = vmatpush1.msra.mxu0 0.0
    %197 = vmatprep.subr.mxu0 0.0
    %198 = vmatpush1.msra.mxu0 0.0
    %199 = vmatprep.subr.mxu0 0.0
    %200 = vmatpush1.msra.mxu0 0.0
    %201 = vmatprep.subr.mxu0 0.0
    %202 = vmatpush1.msra.mxu0 0.0
    %203 = vmatprep.subr.mxu0 0.0
    %204 = vmatpush1.msra.mxu0 0.0
    %205 = vmatprep.subr.mxu0 0.0
    %206 = vmatpush1.msra.mxu0 0.0
    %207 = vmatprep.subr.mxu0 0.0
    %208 = vmatpush1.msra.mxu0 0.0
    %209 = vmatprep.subr.mxu0 0.0
    %210 = vmatpush1.msra.mxu0 0.0
    %211 = vmatprep.subr.mxu0 0.0
    %212 = vmatpush1.msra.mxu0 0.0
    %213 = vmatprep.subr.mxu0 0.0
    %214 = vmatpush1.msra.mxu0 0.0
    %215 = vmatprep.subr.mxu0 0.0
    %216 = vmatpush1.msra.mxu0 0.0
    %217 = vmatprep.subr.mxu0 0.0
    %218 = vmatpush1.msra.mxu0 0.0
    %219 = vmatprep.subr.mxu0 0.0
    %220 = vmatpush1.msra.mxu0 0.0
    %221 = vmatprep.subr.mxu0 0.0
    %222 = vmatpush1.msra.mxu0 0.0
    %223 = vmatprep.subr.mxu0 0.0
    %224 = vmatpush1.msra.mxu0 0.0
    %225 = vmatprep.subr.mxu0 0.0
    %226 = vmatpush1.msra.mxu0 0.0
    %227 = vmatprep.mubr.f32.mxu0 0.0
    %228 = vmatmul.mubr.f32.gmra.mrb[0].mxu0 %v161
    %v229 = vpop.f32.mrb[0].mxu0
    %v230 = vadd.f32 %v158, %v229
    %v231 = vpop.f32.mrb[0].mxu0
    %232 = vdwg.mxu0
    %233 = vst [vmem:[#allocation3] sm:$0x1] %v230
    // Predicated region
    $region30: #{tpu_custom_call.1} parent=1 // pred_check
      _
    $region31: #{tpu_custom_call.1} parent=1 // pred_check_branch
      %235 = sbr.rel (0) target = $region33
    $region32: #{tpu_custom_call.1} parent=1 // pred_region
      %s237 = ssub.s32 16, 16
      %238 = vsyncadd [#allocation4], %s237
      %s240 = sshll.u32 [#allocation3], 4
      %s241 = int_to_ptr.vmem [resolvable:$true] %s240
      %243 = dma.vmem_to_hbm [thread:$0]  %s241, 16, %s7, [#allocation4]
    $region33: #{tpu_custom_call.1} parent=1 // pred_fallthru
      _
    // Predicated region
    $region34: #{tpu_custom_call.1} parent=1 // pred_check
      _
    $region35: #{tpu_custom_call.1} parent=1 // pred_check_branch
      %245 = sbr.rel (0) target = $region37
    $region36: #{tpu_custom_call.1} parent=1 // pred_region
      %246 = dma.done [#allocation4], 16
    $region37: #{tpu_custom_call.1} parent=1 // pred_fallthru
      _
    %247 = vsyncpa [#allocation4], 1

</llo_original>
